<compile_context>
chip_gen: v6e
topology: v6e:2x2x1
jax: 0.10.0
libtpu: 0.0.40
codegen_flags: <defaults>
</compile_context>

<pallas_src>
import math
from functools import partial

import jax
import jax.numpy as jnp
from jax import lax
from jax.experimental import pallas as pl
from jax.experimental.pallas import tpu as pltpu


def _round_up(x, m):
    return (x + m - 1) // m * m


def _flash_attn_kernel(q_ref, k_ref, v_ref, vl_ref, o_ref, m_scr, l_scr, *, kv_tile):
    """One (batch, q-tile, kv-tile) grid step of flash attention.

    q_ref : (1, TQ, Dp)  bf16, pre-scaled by 1/sqrt(d) in the wrapper
    k_ref : (1, TK, Dp)  bf16
    v_ref : (1, TK, DVp) bf16 (padded rows are zero)
    vl_ref: (1, TQ, 1)   int32 valid lengths, clamped to NK in the wrapper
    o_ref : (1, TQ, DVp) f32, resident across the kv axis -> flash accumulator
    m_scr/l_scr: (TQ, 1) f32 running max / running sum
    """
    ki = pl.program_id(2)

    @pl.when(ki == 0)
    def _init():
        m_scr[...] = jnp.full_like(m_scr, -1.0e30)
        l_scr[...] = jnp.zeros_like(l_scr)
        o_ref[0] = jnp.zeros_like(o_ref[0])

    q = q_ref[0]                                                 # (TQ, Dp) bf16
    k = k_ref[0]                                                 # (TK, Dp) bf16
    v = v_ref[0]                                                 # (TK, DVp) bf16

    # Q @ K^T as a contraction over d (no explicit K transpose); bf16 MXU, f32 acc.
    s = lax.dot_general(q, k, dimension_numbers=(((1,), (1,)), ((), ())),
                        preferred_element_type=jnp.float32)      # (TQ, TK) f32

    # SequenceMask semantics: positions >= valid_len get -1e6. Since vl <= NK,
    # this also masks the zero-padded key columns. The kv offset lives on the
    # (TQ, 1) side; the iota is a loop-invariant (1, TK) vector.
    vl_local = vl_ref[0] - ki * kv_tile                          # (TQ, 1) int32
    col = lax.broadcasted_iota(jnp.int32, (1, s.shape[1]), 1)    # (1, TK)
    s = jnp.where(col < vl_local, s, jnp.float32(-1.0e6))

    # Online (flash) softmax update in f32.
    m_prev = m_scr[...]
    m_new = jnp.maximum(m_prev, jnp.max(s, axis=-1, keepdims=True))
    alpha = jnp.exp(m_prev - m_new)
    p = jnp.exp(s - m_new)
    l_scr[...] = alpha * l_scr[...] + jnp.sum(p, axis=-1, keepdims=True)
    o_ref[0] = alpha * o_ref[0] + jnp.dot(p.astype(jnp.bfloat16), v,
                                          preferred_element_type=jnp.float32)
    m_scr[...] = m_new

    @pl.when(ki == pl.num_programs(2) - 1)
    def _finalize():
        o_ref[0] = o_ref[0] * pl.reciprocal(l_scr[...], approx=True)  # EUP slot


def dot_product_attention(queries, keys, values, valid_lens=None,
                          *, q_tile=512, kv_tile=256):
    """Pallas TPU scaled dot-product attention with masked softmax (flash-style)."""
    queries = jnp.asarray(queries, jnp.float32)
    keys = jnp.asarray(keys, jnp.float32)
    values = jnp.asarray(values, jnp.float32)

    B, NQ, D = queries.shape
    _, NK, _ = keys.shape
    DV = values.shape[-1]

    # Lane-dense last dims (multiples of 128); bf16-friendly (mult-of-16) row tiles.
    Dp = _round_up(D, 128)
    DVp = _round_up(DV, 128)
    TQ = min(q_tile, _round_up(NQ, 16))
    TK = min(kv_tile, _round_up(NK, 16))

    # Megacore (v7x): keep >= 4 (batch, q-tile) blocks so both TCs get work.
    while TQ > 256 and B * ((NQ + TQ - 1) // TQ) < 4:
        TQ //= 2

    # Device-aware VMEM budget (v7x has only 64 MiB per core).
    try:
        vmem_cap = int(pltpu.get_tpu_info().vmem_capacity_bytes)
    except Exception:
        vmem_cap = 64 * 1024 * 1024

    def _working_bytes(tq, tk):
        return (2 * (tq * Dp + tk * Dp + tk * DVp) * 2   # bf16 q/k/v blocks, 2 bufs
                + 2 * tq * 128 * 4                        # int32 valid_lens (lane-padded)
                + 2 * tq * DVp * 4                        # f32 output blocks
                + 2 * tq * 128 * 4)                       # f32 m/l scratch (lane-padded)

    # Shrink tiles only if the working set would crowd VMEM (large head dims).
    while _working_bytes(TQ, TK) > int(0.6 * vmem_cap) and max(TQ, TK) > 128:
        if TQ >= TK:
            TQ //= 2
        else:
            TK //= 2

    NQp = _round_up(NQ, TQ)
    NKp = _round_up(NK, TK)

    # bf16 operand streams (halves K/V HBM->VMEM traffic). 1/sqrt(d) is folded
    # into the same fused pad/cast, so the kernel does no per-step Q scaling.
    inv_sqrt_d = 1.0 / math.sqrt(D)
    q_p = jnp.pad(queries * jnp.float32(inv_sqrt_d),
                  ((0, 0), (0, NQp - NQ), (0, Dp - D))).astype(jnp.bfloat16)
    k_p = jnp.pad(keys, ((0, 0), (0, NKp - NK), (0, Dp - D))).astype(jnp.bfloat16)
    v_p = jnp.pad(values, ((0, 0), (0, NKp - NK), (0, DVp - DV))).astype(jnp.bfloat16)

    # Normalize valid_lens to (B, NQp, 1) int32, clamped to NK (so padded key
    # columns are always masked by the single -1e6 where in the kernel).
    if valid_lens is None:
        vl = jnp.full((B, NQp), NK, dtype=jnp.int32)
    else:
        valid_lens = jnp.asarray(valid_lens)
        if valid_lens.ndim == 1:
            # torch.repeat_interleave(valid_lens, NQ) == broadcast over queries
            vl = jnp.broadcast_to(valid_lens.astype(jnp.int32)[:, None], (B, NQ))
        else:
            vl = valid_lens.astype(jnp.int32)
        vl = jnp.minimum(vl, NK)
        vl = jnp.pad(vl, ((0, 0), (0, NQp - NQ)), constant_values=NK)
    vl = vl.reshape(B, NQp, 1)

    grid = (B, NQp // TQ, NKp // TK)
    kernel = partial(_flash_attn_kernel, kv_tile=TK)

    vmem_limit = int(min(int(0.8 * vmem_cap),
                         max(16 * 1024 * 1024, 4 * _working_bytes(TQ, TK))))

    n_q_tiles = NQp // TQ
    n_kv_tiles = NKp // TK
    cost = pl.CostEstimate(
        flops=2 * B * NQp * NKp * (Dp + DVp),
        transcendentals=B * NQp * NKp,
        bytes_accessed=int(2 * B * NQp * Dp                          # Q (bf16, once)
                           + 2 * B * n_q_tiles * NKp * (Dp + DVp)    # K/V re-streamed
                           + 4 * B * NQp * DVp                       # output (f32)
                           + 4 * B * NQp * n_kv_tiles),              # valid_lens
    )

    # Deeper K/V pipelining only on v5e (slow HBM relative to its MXU).
    kv_pipeline_kwargs = {}
    try:
        kind = jax.devices()[0].device_kind.lower()
        if ("v5 lite" in kind) or ("v5e" in kind) or ("v5litepod" in kind):
            kv_pipeline_kwargs = dict(pipeline_mode=pl.Buffered(3))
    except Exception:
        pass

    out = pl.pallas_call(
        kernel,
        out_shape=jax.ShapeDtypeStruct((B, NQp, DVp), jnp.float32),
        grid_spec=pltpu.PrefetchScalarGridSpec(
            num_scalar_prefetch=0,
            grid=grid,
            in_specs=[
                pl.BlockSpec((1, TQ, Dp), lambda b, qi, ki: (b, qi, 0)),
                pl.BlockSpec((1, TK, Dp), lambda b, qi, ki: (b, ki, 0),
                             **kv_pipeline_kwargs),
                pl.BlockSpec((1, TK, DVp), lambda b, qi, ki: (b, ki, 0),
                             **kv_pipeline_kwargs),
                pl.BlockSpec((1, TQ, 1), lambda b, qi, ki: (b, qi, 0)),
            ],
            out_specs=pl.BlockSpec((1, TQ, DVp), lambda b, qi, ki: (b, qi, 0)),
            scratch_shapes=[
                pltpu.VMEM((TQ, 1), jnp.float32),   # running max
                pltpu.VMEM((TQ, 1), jnp.float32),   # running sum
            ],
        ),
        compiler_params=pltpu.CompilerParams(
            dimension_semantics=("parallel", "parallel", "arbitrary"),
            vmem_limit_bytes=vmem_limit,
        ),
        cost_estimate=cost,
    )(q_p, k_p, v_p, vl)

    return out[:, :NQ, :DV]


def _reference(queries, keys, values, valid_lens=None):
    """Pure-JAX reference mirroring the PyTorch module."""
    d = queries.shape[-1]
    scores = jnp.einsum("bqd,bkd->bqk", queries, keys) / jnp.sqrt(jnp.float32(d))
    if valid_lens is not None:
        vl = jnp.asarray(valid_lens)
        if vl.ndim == 1:
            vl = jnp.broadcast_to(vl[:, None], scores.shape[:2])
        col = jnp.arange(scores.shape[-1])[None, None, :]
        scores = jnp.where(col < vl[:, :, None], scores, -1000000.0)
    w = jax.nn.softmax(scores, axis=-1)
    return jnp.einsum("bqk,bkv->bqv", w, values)


if __name__ == "__main__":
    key = jax.random.PRNGKey(0)
    k1, k2, k3 = jax.random.split(key, 3)

    # Small shapes consistent with the module.
    B, NQ, NK, D, DV = 2, 8, 8, 32, 32
    queries = jax.random.normal(k1, (B, NQ, D), dtype=jnp.float32)
    keys = jax.random.normal(k2, (B, NK, D), dtype=jnp.float32)
    values = jax.random.normal(k3, (B, NK, DV), dtype=jnp.float32)
    valid_lens_1d = jnp.array([3, 6], dtype=jnp.int32)   # 1-D case: one len per batch

    # bf16 MXU operands (f32 accumulation) => bf16-appropriate tolerance.
    tol = dict(atol=2e-2, rtol=2e-2)

    out = jax.block_until_ready(dot_product_attention(queries, keys, values, valid_lens_1d))
    ref = _reference(queries, keys, values, valid_lens_1d)
    assert out.shape == (B, NQ, DV)
    assert jnp.allclose(out, ref, **tol), "mismatch vs reference (1-D valid_lens)"

    # valid_lens=None path (plain softmax).
    out2 = jax.block_until_ready(dot_product_attention(queries, keys, values, None))
    ref2 = _reference(queries, keys, values, None)
    assert jnp.allclose(out2, ref2, **tol), "mismatch vs reference (no mask)"

    # Non-aligned shapes with small tiles: exercises padding, multi-step online
    # softmax (several KV tiles per query tile) and 2-D valid_lens.
    k4, k5, k6, k7 = jax.random.split(jax.random.PRNGKey(1), 4)
    B2, NQ2, NK2, D2, DV2 = 2, 40, 24, 24, 20
    q2 = jax.random.normal(k4, (B2, NQ2, D2), dtype=jnp.float32)
    kk2 = jax.random.normal(k5, (B2, NK2, D2), dtype=jnp.float32)
    v2 = jax.random.normal(k6, (B2, NK2, DV2), dtype=jnp.float32)
    vl2 = jax.random.randint(k7, (B2, NQ2), 1, NK2 + 1).astype(jnp.int32)

    out3 = jax.block_until_ready(
        dot_product_attention(q2, kk2, v2, vl2, q_tile=16, kv_tile=16))
    ref3 = _reference(q2, kk2, v2, vl2)
    assert out3.shape == (B2, NQ2, DV2)
    assert jnp.allclose(out3, ref3, **tol), "mismatch vs reference (2-D valid_lens, tiled)"

    print("KERNEL_OK")
</pallas_src>

<mosaic_0001>
module attributes {stable_mosaic.version = 11 : i64} {
  func.func @_flash_attn_kernel(%arg0: i32, %arg1: i32, %arg2: i32, %arg3: memref<1x16x128xbf16, #tpu.memory_space<vmem>>, %arg4: memref<1x16x128xbf16, #tpu.memory_space<vmem>>, %arg5: memref<1x16x128xbf16, #tpu.memory_space<vmem>>, %arg6: memref<1x16x1xi32, #tpu.memory_space<vmem>>, %arg7: memref<1x16x128xf32, #tpu.memory_space<vmem>>, %arg8: memref<16x1xf32, #tpu.memory_space<vmem>>, %arg9: memref<16x1xf32, #tpu.memory_space<vmem>>) attributes {dimension_semantics = [#tpu.dimension_semantics<parallel>, #tpu.dimension_semantics<parallel>, #tpu.dimension_semantics<arbitrary>], iteration_bounds = array<i64: 2, 1, 1>, scalar_prefetch = 0 : i64, scratch_operands = 2 : i64, tpu.core_type = #tpu.core_type<tc>, window_params = [{transform_indices = @transform_0, window_bounds = array<i64: 1, 16, 128>}, {transform_indices = @transform_1, window_bounds = array<i64: 1, 16, 128>}, {transform_indices = @transform_2, window_bounds = array<i64: 1, 16, 128>}, {transform_indices = @transform_3, window_bounds = array<i64: 1, 16, 1>}, {transform_indices = @transform_4, window_bounds = array<i64: 1, 16, 128>}]} {
    %c0_i32 = arith.constant 0 : i32
    %0 = arith.cmpi eq, %arg2, %c0_i32 : i32
    %1 = arith.extui %0 : i1 to i32
    %c0_i32_0 = arith.constant 0 : i32
    %2 = arith.cmpi ne, %1, %c0_i32_0 : i32
    scf.if %2 {
      %cst_32 = arith.constant -1.000000e+30 : f32
      %50 = vector.broadcast %cst_32 : f32 to vector<16x1xf32>
      %c0_33 = arith.constant 0 : index
      %c0_34 = arith.constant 0 : index
      %51 = vector.load %arg8[%c0_33, %c0_34] : memref<16x1xf32, #tpu.memory_space<vmem>>, vector<16x1xf32>
      tpu.vector_store %arg8[%c0_33, %c0_34], %50 {strides = array<i32>} : memref<16x1xf32, #tpu.memory_space<vmem>>, vector<16x1xf32>,
      %cst_35 = arith.constant 0.000000e+00 : f32
      %52 = vector.broadcast %cst_35 : f32 to vector<16x1xf32>
      %c0_36 = arith.constant 0 : index
      %c0_37 = arith.constant 0 : index
      %53 = vector.load %arg9[%c0_36, %c0_37] : memref<16x1xf32, #tpu.memory_space<vmem>>, vector<16x1xf32>
      tpu.vector_store %arg9[%c0_36, %c0_37], %52 {strides = array<i32>} : memref<16x1xf32, #tpu.memory_space<vmem>>, vector<16x1xf32>,
      %cst_38 = arith.constant 0.000000e+00 : f32
      %54 = vector.broadcast %cst_38 : f32 to vector<16x128xf32>
      %c0_39 = arith.constant 0 : index
      %c0_40 = arith.constant 0 : index
      %c0_41 = arith.constant 0 : index
      %55 = vector.load %arg7[%c0_39, %c0_40, %c0_41] : memref<1x16x128xf32, #tpu.memory_space<vmem>>, vector<1x16x128xf32>
      %56 = vector.shape_cast %55 : vector<1x16x128xf32> to vector<16x128xf32>
      %57 = vector.shape_cast %54 : vector<16x128xf32> to vector<1x16x128xf32>
      tpu.vector_store %arg7[%c0_39, %c0_40, %c0_41], %57 {strides = array<i32>} : memref<1x16x128xf32, #tpu.memory_space<vmem>>, vector<1x16x128xf32>,
    } else {
    }
    %c0 = arith.constant 0 : index
    %c0_1 = arith.constant 0 : index
    %c0_2 = arith.constant 0 : index
    %3 = vector.load %arg3[%c0, %c0_1, %c0_2] : memref<1x16x128xbf16, #tpu.memory_space<vmem>>, vector<1x16x128xbf16>
    %4 = vector.shape_cast %3 : vector<1x16x128xbf16> to vector<16x128xbf16>
    %c0_3 = arith.constant 0 : index
    %c0_4 = arith.constant 0 : index
    %c0_5 = arith.constant 0 : index
    %5 = vector.load %arg4[%c0_3, %c0_4, %c0_5] : memref<1x16x128xbf16, #tpu.memory_space<vmem>>, vector<1x16x128xbf16>
    %6 = vector.shape_cast %5 : vector<1x16x128xbf16> to vector<16x128xbf16>
    %c0_6 = arith.constant 0 : index
    %c0_7 = arith.constant 0 : index
    %c0_8 = arith.constant 0 : index
    %7 = vector.load %arg5[%c0_6, %c0_7, %c0_8] : memref<1x16x128xbf16, #tpu.memory_space<vmem>>, vector<1x16x128xbf16>
    %8 = vector.shape_cast %7 : vector<1x16x128xbf16> to vector<16x128xbf16>
    %cst = arith.constant dense<0.000000e+00> : vector<16x16xf32>
    %9 = tpu.matmul %4, %6, %cst {dimension_numbers = #tpu.dot_dimension_numbers<[1], [1], [0], [0], [0, 0, 1, 0], [], []>} : vector<16x128xbf16>, vector<16x128xbf16>, vector<16x16xf32> -> vector<16x16xf32>
    %c0_9 = arith.constant 0 : index
    %c0_10 = arith.constant 0 : index
    %c0_11 = arith.constant 0 : index
    %10 = vector.load %arg6[%c0_9, %c0_10, %c0_11] : memref<1x16x1xi32, #tpu.memory_space<vmem>>, vector<1x16x1xi32>
    %11 = vector.shape_cast %10 : vector<1x16x1xi32> to vector<16x1xi32>
    %c16_i32 = arith.constant 16 : i32
    %12 = arith.muli %arg2, %c16_i32 : i32
    %13 = vector.broadcast %12 : i32 to vector<16x1xi32>
    %14 = arith.subi %11, %13 : vector<16x1xi32>
    %15 = tpu.iota {dimensions = array<i32: 1>} : vector<1x16xi32>
    %16 = vector.broadcast %15 : vector<1x16xi32> to vector<16x16xi32>
    %17 = vector.broadcast %14 : vector<16x1xi32> to vector<16x16xi32>
    %18 = arith.cmpi slt, %16, %17 : vector<16x16xi32>
    %cst_12 = arith.constant -1.000000e+06 : f32
    %19 = vector.broadcast %cst_12 : f32 to vector<16x16xf32>
    %20 = arith.select %18, %9, %19 : vector<16x16xi1>, vector<16x16xf32>
    %c0_13 = arith.constant 0 : index
    %c0_14 = arith.constant 0 : index
    %21 = vector.load %arg8[%c0_13, %c0_14] : memref<16x1xf32, #tpu.memory_space<vmem>>, vector<16x1xf32>
    %cst_15 = arith.constant dense<0xFF800000> : vector<16xf32>
    %22 = vector.multi_reduction <maximumf>, %20, %cst_15 [1] : vector<16x16xf32> to vector<16xf32>
    %23 = vector.shape_cast %22 : vector<16xf32> to vector<16x1xf32>
    %24 = arith.maximumf %21, %23 : vector<16x1xf32>
    %25 = arith.subf %21, %24 : vector<16x1xf32>
    %26 = math.exp %25 : vector<16x1xf32>
    %27 = vector.broadcast %24 : vector<16x1xf32> to vector<16x16xf32>
    %28 = arith.subf %20, %27 : vector<16x16xf32>
    %29 = math.exp %28 : vector<16x16xf32>
    %c0_16 = arith.constant 0 : index
    %c0_17 = arith.constant 0 : index
    %30 = vector.load %arg9[%c0_16, %c0_17] : memref<16x1xf32, #tpu.memory_space<vmem>>, vector<16x1xf32>
    %31 = arith.mulf %26, %30 : vector<16x1xf32>
    %cst_18 = arith.constant dense<0.000000e+00> : vector<16xf32>
    %32 = vector.multi_reduction <add>, %29, %cst_18 [1] : vector<16x16xf32> to vector<16xf32>
    %33 = vector.shape_cast %32 : vector<16xf32> to vector<16x1xf32>
    %34 = arith.addf %31, %33 : vector<16x1xf32>
    %c0_19 = arith.constant 0 : index
    %c0_20 = arith.constant 0 : index
    %35 = vector.load %arg9[%c0_19, %c0_20] : memref<16x1xf32, #tpu.memory_space<vmem>>, vector<16x1xf32>
    tpu.vector_store %arg9[%c0_19, %c0_20], %34 {strides = array<i32>} : memref<16x1xf32, #tpu.memory_space<vmem>>, vector<16x1xf32>,
    %c0_21 = arith.constant 0 : index
    %c0_22 = arith.constant 0 : index
    %c0_23 = arith.constant 0 : index
    %36 = vector.load %arg7[%c0_21, %c0_22, %c0_23] : memref<1x16x128xf32, #tpu.memory_space<vmem>>, vector<1x16x128xf32>
    %37 = vector.shape_cast %36 : vector<1x16x128xf32> to vector<16x128xf32>
    %38 = vector.broadcast %26 : vector<16x1xf32> to vector<16x128xf32>
    %39 = arith.mulf %38, %37 : vector<16x128xf32>
    %40 = arith.truncf %29 : vector<16x16xf32> to vector<16x16xbf16>
    %cst_24 = arith.constant dense<0.000000e+00> : vector<16x128xf32>
    %41 = tpu.matmul %40, %8, %cst_24 {dimension_numbers = #tpu.dot_dimension_numbers<[1], [0], [0], [1], [0, 0, 1, 1], [], []>} : vector<16x16xbf16>, vector<16x128xbf16>, vector<16x128xf32> -> vector<16x128xf32>
    %42 = arith.addf %39, %41 : vector<16x128xf32>
    %c0_25 = arith.constant 0 : index
    %c0_26 = arith.constant 0 : index
    %c0_27 = arith.constant 0 : index
    %43 = vector.load %arg7[%c0_25, %c0_26, %c0_27] : memref<1x16x128xf32, #tpu.memory_space<vmem>>, vector<1x16x128xf32>
    %44 = vector.shape_cast %43 : vector<1x16x128xf32> to vector<16x128xf32>
    %45 = vector.shape_cast %42 : vector<16x128xf32> to vector<1x16x128xf32>
    tpu.vector_store %arg7[%c0_25, %c0_26, %c0_27], %45 {strides = array<i32>} : memref<1x16x128xf32, #tpu.memory_space<vmem>>, vector<1x16x128xf32>,
    %c0_28 = arith.constant 0 : index
    %c0_29 = arith.constant 0 : index
    %46 = vector.load %arg8[%c0_28, %c0_29] : memref<16x1xf32, #tpu.memory_space<vmem>>, vector<16x1xf32>
    tpu.vector_store %arg8[%c0_28, %c0_29], %24 {strides = array<i32>} : memref<16x1xf32, #tpu.memory_space<vmem>>, vector<16x1xf32>,
    %c0_i32_30 = arith.constant 0 : i32
    %47 = arith.cmpi eq, %arg2, %c0_i32_30 : i32
    %48 = arith.extui %47 : i1 to i32
    %c0_i32_31 = arith.constant 0 : i32
    %49 = arith.cmpi ne, %48, %c0_i32_31 : i32
    scf.if %49 {
      %c0_32 = arith.constant 0 : index
      %c0_33 = arith.constant 0 : index
      %c0_34 = arith.constant 0 : index
      %50 = vector.load %arg7[%c0_32, %c0_33, %c0_34] : memref<1x16x128xf32, #tpu.memory_space<vmem>>, vector<1x16x128xf32>
      %51 = vector.shape_cast %50 : vector<1x16x128xf32> to vector<16x128xf32>
      %c0_35 = arith.constant 0 : index
      %c0_36 = arith.constant 0 : index
      %52 = vector.load %arg9[%c0_35, %c0_36] : memref<16x1xf32, #tpu.memory_space<vmem>>, vector<16x1xf32>
      %53 = tpu.reciprocal %52 {approx = true} : vector<16x1xf32> -> vector<16x1xf32>
      %54 = vector.broadcast %53 : vector<16x1xf32> to vector<16x128xf32>
      %55 = arith.mulf %51, %54 : vector<16x128xf32>
      %c0_37 = arith.constant 0 : index
      %c0_38 = arith.constant 0 : index
      %c0_39 = arith.constant 0 : index
      %56 = vector.load %arg7[%c0_37, %c0_38, %c0_39] : memref<1x16x128xf32, #tpu.memory_space<vmem>>, vector<1x16x128xf32>
      %57 = vector.shape_cast %56 : vector<1x16x128xf32> to vector<16x128xf32>
      %58 = vector.shape_cast %55 : vector<16x128xf32> to vector<1x16x128xf32>
      tpu.vector_store %arg7[%c0_37, %c0_38, %c0_39], %58 {strides = array<i32>} : memref<1x16x128xf32, #tpu.memory_space<vmem>>, vector<1x16x128xf32>,
    } else {
    }
    return
  }
  func.func @transform_0(%arg0: i32, %arg1: i32, %arg2: i32) -> (i32, i32, i32) {
    %c0_i32 = arith.constant 0 : i32
    %c0_i32_0 = arith.constant 0 : i32
    return %arg0, %arg1, %c0_i32 : i32, i32, i32
  }
  func.func @transform_1(%arg0: i32, %arg1: i32, %arg2: i32) -> (i32, i32, i32) {
    %c0_i32 = arith.constant 0 : i32
    %c0_i32_0 = arith.constant 0 : i32
    return %arg0, %arg2, %c0_i32 : i32, i32, i32
  }
  func.func @transform_2(%arg0: i32, %arg1: i32, %arg2: i32) -> (i32, i32, i32) {
    %c0_i32 = arith.constant 0 : i32
    %c0_i32_0 = arith.constant 0 : i32
    return %arg0, %arg2, %c0_i32 : i32, i32, i32
  }
  func.func @transform_3(%arg0: i32, %arg1: i32, %arg2: i32) -> (i32, i32, i32) {
    %c0_i32 = arith.constant 0 : i32
    %c0_i32_0 = arith.constant 0 : i32
    return %arg0, %arg1, %c0_i32 : i32, i32, i32
  }
  func.func @transform_4(%arg0: i32, %arg1: i32, %arg2: i32) -> (i32, i32, i32) {
    %c0_i32 = arith.constant 0 : i32
    %c0_i32_0 = arith.constant 0 : i32
    return %arg0, %arg1, %c0_i32 : i32, i32, i32
  }
}

</mosaic_0001>

<llo_original>
// kernel: tpu_custom_call.1
$region0: #{tpu_custom_call.1}
  #allocation0 [shape = 'u32[]', space=smem, size = 0x4, offset = 0x4, fixed_abs, tag = 'smem constant byte address 0x4 - core index']
  #allocation1 [shape = 'u32[144,128]{1,0:T(1,128)}', space=vmem, size = 0x12000, scoped, tag = 'internal scratch']
  #allocation2 [shape = 'f32[16,1]{1,0:T(8,128)}', space=vmem, size = 0x2000, scoped, tag = 'scratch operand']
  #allocation3 [shape = 'f32[16,1]{1,0:T(8,128)}', space=vmem, size = 0x2000, scoped, tag = 'scratch operand']
  %s0 = inlined_call_operand.vmem [shape: bf16[2,16,128], index: 0, kind: input, shape index: {}]
  %s1 = inlined_call_operand.vmem [shape: bf16[2,16,128], index: 1, kind: input, shape index: {}]
  %s2 = inlined_call_operand.hbm [shape: bf16[2,16,128], index: 2, kind: input, shape index: {}]
  %s3 = inlined_call_operand.vmem [shape: s32[2,16,1], index: 3, kind: input, shape index: {}]
  %s4 = inlined_call_operand.hbm [shape: f32[2,16,128], index: 4, kind: output, shape index: {}]
  %s5 = sld [smem:[#allocation0]]
  $region61: #{tpu_custom_call.1} parent=0
    _
  %s7 = ssub.s32 1, %s5
  %s8 = scalar_select 0, %s7, %s5
  $region1: #{tpu_custom_call.1} parent=0
    #allocation4 [shape = 'u8[8192]{0}', space=vmem, size = 0x2000, scoped, tag = 'input window, operand 2']
    #allocation5 [shape = 's32[2]{0}', space=sflag, size = 0x8, scoped, tag = 'scoped memory for tpu_custom_call.1']
    #allocation6 [shape = 's32[2]{0}', space=sflag, size = 0x8, scoped, tag = 'scoped memory for tpu_custom_call.1']
    #allocation7 [shape = 'u8[16384]{0}', space=vmem, size = 0x4000, scoped, tag = 'output window, operand 0']
    %9 = vsyncpa [#allocation5], 0
    %s10 = scalar_lea.sflag [#allocation5], 1
    %11 = vsyncpa %s10, 0
    %12 = vsyncpa [#allocation6], 0
    %s13 = scalar_lea.sflag [#allocation6], 1
    %14 = vsyncpa %s13, 0
    loop: start=0, step=1, limit=4
    $region2: #{tpu_custom_call.1} parent=1 // loop_pre_header
      _
    $region3: #{tpu_custom_call.1} parent=1 // loop_header
      %s16 = sphi 0, %s20
      %p17 = scmp.ge.s32.totalorder %s16, 4
      %s23 = sphi 0, %s42
      %s24 = sphi 0, %s38
      %s25 = sphi 0, %s34
      %s26 = sphi 0, %s23
      %s27 = sphi 0, %s24
      %s28 = sphi 0, %s25
      %s29 = sphi 0, %s26
      %s30 = sphi 0, %s27
      %s31 = sphi 0, %s28
      %s47 = sphi 0, %s49
      %s50 = sphi 0, %s47
      %s51 = sphi 0, %s50
      %s67 = sphi 0, %s51
      %s75 = sphi 0, %s77
      %s78 = sphi 0, %s75
      %s79 = sphi 0, %s78
      %s95 = sphi 0, %s79
      %s103 = sphi 0, %s105
      %s106 = sphi 0, %s103
      %s107 = sphi 0, %s106
      %s123 = sphi 0, %s107
      %s131 = sphi 0, %s133
      %s134 = sphi 0, %s131
      %s135 = sphi 0, %s134
      %s151 = sphi 0, %s135
      %s159 = sphi 0, %s161
      %s162 = sphi 0, %s159
      %s163 = sphi 0, %s162
      %s179 = sphi 0, %s163
    $region4: #{tpu_custom_call.1} parent=1 // loop_header_branch
      %19 = sbr.rel (%p17) target = $region8
    $region5: #{tpu_custom_call.1} parent=1 // loop_body
      %s21 = ssub.s32 %s16, 1
      %s22 = ssub.s32 %s16, 2
      %s32 = sadd.s32 1, %s25
      %p33 = scmp.ge.s32.totalorder %s32, 1
      %s34 = scalar_select %p33, 0, %s32
      %s35 = sadd.s32 1, %s24
      %s36 = scalar_select %p33, %s35, %s24
      %p37 = scmp.ge.s32.totalorder %s36, 1
      %s38 = scalar_select %p37, 0, %s36
      %s39 = sadd.s32 1, %s23
      %s40 = scalar_select %p37, %s39, %s23
      %p41 = scmp.ge.s32.totalorder %s40, 2
      %s42 = scalar_select %p41, 0, %s40
      %s43 = ssub.s32 %s23, %s42
      %s44 = ssub.s32 %s24, %s38
      %s45 = sor.u32 %s43, %s44
      %p46 = scmp.eq.s32.totalorder %s45, 0
      %s48 = sadd.s32 %s47, 1
      %s49 = scalar_select %p46, %s47, %s48
      %p52 = pneg %p46
      %p53 = scmp.eq.s32.totalorder %s16, 1
      %p54 = por %p52, %p53
      %p55 = scmp.ne.s32.totalorder %s47, %s50
      %p56 = scmp.eq.s32.totalorder %s16, 0
      %p57 = por %p55, %p56
      %p58 = scmp.ne.s32.totalorder %s47, %s50
      %p59 = scmp.eq.s32.totalorder %s21, 1
      %p60 = por %p58, %p59
      %p61 = scmp.ne.s32.totalorder %s50, %s51
      %p62 = scmp.eq.s32.totalorder %s21, 0
      %p63 = por %p61, %p62
      %p64 = scmp.ne.s32.totalorder %s50, %s51
      %p65 = scmp.eq.s32.totalorder %s22, 1
      %p66 = por %p64, %p65
      %p68 = scmp.ne.s32.totalorder %s51, %s67
      %p69 = scmp.eq.s32.totalorder %s22, 0
      %p70 = por %p68, %p69
      %s71 = ssub.s32 %s23, %s42
      %s72 = ssub.s32 %s25, %s34
      %s73 = sor.u32 %s71, %s72
      %p74 = scmp.eq.s32.totalorder %s73, 0
      %s76 = sadd.s32 %s75, 1
      %s77 = scalar_select %p74, %s75, %s76
      %p80 = pneg %p74
      %p81 = scmp.eq.s32.totalorder %s16, 1
      %p82 = por %p80, %p81
      %p83 = scmp.ne.s32.totalorder %s75, %s78
      %p84 = scmp.eq.s32.totalorder %s16, 0
      %p85 = por %p83, %p84
      %p86 = scmp.ne.s32.totalorder %s75, %s78
      %p87 = scmp.eq.s32.totalorder %s21, 1
      %p88 = por %p86, %p87
      %p89 = scmp.ne.s32.totalorder %s78, %s79
      %p90 = scmp.eq.s32.totalorder %s21, 0
      %p91 = por %p89, %p90
      %p92 = scmp.ne.s32.totalorder %s78, %s79
      %p93 = scmp.eq.s32.totalorder %s22, 1
      %p94 = por %p92, %p93
      %p96 = scmp.ne.s32.totalorder %s79, %s95
      %p97 = scmp.eq.s32.totalorder %s22, 0
      %p98 = por %p96, %p97
      %s99 = ssub.s32 %s23, %s42
      %s100 = ssub.s32 %s25, %s34
      %s101 = sor.u32 %s99, %s100
      %p102 = scmp.eq.s32.totalorder %s101, 0
      %s104 = sadd.s32 %s103, 1
      %s105 = scalar_select %p102, %s103, %s104
      %p108 = pneg %p102
      %p109 = scmp.eq.s32.totalorder %s16, 1
      %p110 = por %p108, %p109
      %p111 = scmp.ne.s32.totalorder %s103, %s106
      %p112 = scmp.eq.s32.totalorder %s16, 0
      %p113 = por %p111, %p112
      %p114 = scmp.ne.s32.totalorder %s103, %s106
      %p115 = scmp.eq.s32.totalorder %s21, 1
      %p116 = por %p114, %p115
      %p117 = scmp.ne.s32.totalorder %s106, %s107
      %p118 = scmp.eq.s32.totalorder %s21, 0
      %p119 = por %p117, %p118
      %p120 = scmp.ne.s32.totalorder %s106, %s107
      %p121 = scmp.eq.s32.totalorder %s22, 1
      %p122 = por %p120, %p121
      %p124 = scmp.ne.s32.totalorder %s107, %s123
      %p125 = scmp.eq.s32.totalorder %s22, 0
      %p126 = por %p124, %p125
      %s127 = ssub.s32 %s23, %s42
      %s128 = ssub.s32 %s24, %s38
      %s129 = sor.u32 %s127, %s128
      %p130 = scmp.eq.s32.totalorder %s129, 0
      %s132 = sadd.s32 %s131, 1
      %s133 = scalar_select %p130, %s131, %s132
      %p136 = pneg %p130
      %p137 = scmp.eq.s32.totalorder %s16, 1
      %p138 = por %p136, %p137
      %p139 = scmp.ne.s32.totalorder %s131, %s134
      %p140 = scmp.eq.s32.totalorder %s16, 0
      %p141 = por %p139, %p140
      %p142 = scmp.ne.s32.totalorder %s131, %s134
      %p143 = scmp.eq.s32.totalorder %s21, 1
      %p144 = por %p142, %p143
      %p145 = scmp.ne.s32.totalorder %s134, %s135
      %p146 = scmp.eq.s32.totalorder %s21, 0
      %p147 = por %p145, %p146
      %p148 = scmp.ne.s32.totalorder %s134, %s135
      %p149 = scmp.eq.s32.totalorder %s22, 1
      %p150 = por %p148, %p149
      %p152 = scmp.ne.s32.totalorder %s135, %s151
      %p153 = scmp.eq.s32.totalorder %s22, 0
      %p154 = por %p152, %p153
      %s155 = ssub.s32 %s23, %s42
      %s156 = ssub.s32 %s24, %s38
      %s157 = sor.u32 %s155, %s156
      %p158 = scmp.eq.s32.totalorder %s157, 0
      %s160 = sadd.s32 %s159, 1
      %s161 = scalar_select %p158, %s159, %s160
      %p164 = pneg %p158
      %p165 = scmp.eq.s32.totalorder %s16, 1
      %p166 = por %p164, %p165
      %p167 = scmp.ne.s32.totalorder %s159, %s162
      %p168 = scmp.eq.s32.totalorder %s16, 0
      %p169 = por %p167, %p168
      %p170 = scmp.ne.s32.totalorder %s159, %s162
      %p171 = scmp.eq.s32.totalorder %s21, 1
      %p172 = por %p170, %p171
      %p173 = scmp.ne.s32.totalorder %s162, %s163
      %p174 = scmp.eq.s32.totalorder %s21, 0
      %p175 = por %p173, %p174
      %p176 = scmp.ne.s32.totalorder %s162, %s163
      %p177 = scmp.eq.s32.totalorder %s22, 1
      %p178 = por %p176, %p177
      %p180 = scmp.ne.s32.totalorder %s163, %s179
      %p181 = scmp.eq.s32.totalorder %s22, 0
      %p182 = por %p180, %p181
      %p183 = scmp.le.s32.totalorder 1, %s16
      %p184 = scmp.lt.s32.totalorder %s16, 3
      %p185 = pnand %p183, %p184
      %p186 = pneg %p185
      // Predicated region
      $region9: #{tpu_custom_call.1} parent=5 // pred_check
        _
      $region10: #{tpu_custom_call.1} parent=5 // pred_check_branch
        %188 = sbr.rel (%p185) target = $region12
      $region11: #{tpu_custom_call.1} parent=5 // pred_region
        %s189 = ssub.s32 %s16, 1
      $region12: #{tpu_custom_call.1} parent=5 // pred_fallthru
        _
      %p190 = scmp.lt.s32.totalorder %s16, 2
      // Predicated region
      $region13: #{tpu_custom_call.1} parent=5 // pred_check
        %p191 = pneg %p190
      $region14: #{tpu_custom_call.1} parent=5 // pred_check_branch
        %193 = sbr.rel (%p191) target = $region16
      $region15: #{tpu_custom_call.1} parent=5 // pred_region
        // Predicated region
        $region17: #{tpu_custom_call.1} parent=15 // pred_check
          %p194 = pneg %p57
        $region18: #{tpu_custom_call.1} parent=15 // pred_check_branch
          %196 = sbr.rel (%p194) target = $region20
        $region19: #{tpu_custom_call.1} parent=15 // pred_region
          %s197 = smul.u32 2, %s24
          %p198 = scmp.lt.s32.totalorder %s23, 1
          %s199 = scalar_select %p198, %s23, 1
          %p200 = scmp.lt.s32.totalorder %s197, 1
          %s201 = scalar_select %p200, %s197, 1
          %s202 = smul.addr %s199, 2
          %s203 = sadd.s32 %s201, %s202
          %s204 = smul.addr %s203, 4
          %s205 = scalar_lea.vmem %s0, %s204
          %s206 = smul.u32 2, %s24
        $region20: #{tpu_custom_call.1} parent=15 // pred_fallthru
          _
        // Predicated region
        $region21: #{tpu_custom_call.1} parent=15 // pred_check
          %p207 = pneg %p85
        $region22: #{tpu_custom_call.1} parent=15 // pred_check_branch
          %209 = sbr.rel (%p207) target = $region24
        $region23: #{tpu_custom_call.1} parent=15 // pred_region
          %s210 = smul.u32 2, %s25
          %p211 = scmp.lt.s32.totalorder %s23, 1
          %s212 = scalar_select %p211, %s23, 1
          %p213 = scmp.lt.s32.totalorder %s210, 1
          %s214 = scalar_select %p213, %s210, 1
          %s215 = smul.addr %s212, 2
          %s216 = sadd.s32 %s214, %s215
          %s217 = smul.addr %s216, 4
          %s218 = scalar_lea.vmem %s1, %s217
          %s219 = smul.u32 2, %s25
        $region24: #{tpu_custom_call.1} parent=15 // pred_fallthru
          _
        // Predicated region
        $region25: #{tpu_custom_call.1} parent=15 // pred_check
          %p220 = pneg %p113
        $region26: #{tpu_custom_call.1} parent=15 // pred_check_branch
          %222 = sbr.rel (%p220) target = $region28
        $region27: #{tpu_custom_call.1} parent=15 // pred_region
          %s223 = sand.u32 %s103, 1
          %s224 = scalar_lea.sflag [#allocation5], %s223
          %s225 = sand.u32 %s103, 1
          %s226 = smul.addr %s225, 8
          %s227 = scalar_lea.vmem [#allocation4], %s226
          %s228 = smul.u32 2, %s25
          %s230 = ssub.s32 128, 128
          %231 = vsyncadd %s224, %s230
          %s232 = smul.addr %s23, 2
          %s233 = sadd.s32 %s228, %s232
          %s234 = smul.addr %s233, 64
          %s235 = scalar_lea.hbm %s2, %s234
          %s236 = sshll.u32 %s227, 4
          %s237 = int_to_ptr.vmem [resolvable:$true] %s236
          %242 = dma.hbm_to_vmem [thread:$0]  %s235, 128, %s237, %s224, 64, 64, 4
        $region28: #{tpu_custom_call.1} parent=15 // pred_fallthru
          _
        // Predicated region
        $region29: #{tpu_custom_call.1} parent=15 // pred_check
          %p243 = pneg %p141
        $region30: #{tpu_custom_call.1} parent=15 // pred_check_branch
          %245 = sbr.rel (%p243) target = $region32
        $region31: #{tpu_custom_call.1} parent=15 // pred_region
          %s246 = smul.u32 2, %s24
          %p247 = scmp.lt.s32.totalorder %s23, 1
          %s248 = scalar_select %p247, %s23, 1
          %p249 = scmp.lt.s32.totalorder %s246, 1
          %s250 = scalar_select %p249, %s246, 1
          %s251 = smul.addr %s248, 2
          %s252 = sadd.s32 %s250, %s251
          %s253 = smul.addr %s252, 8
          %s254 = scalar_lea.vmem %s3, %s253
          %s255 = smul.u32 2, %s24
        $region32: #{tpu_custom_call.1} parent=15 // pred_fallthru
          _
      $region16: #{tpu_custom_call.1} parent=5 // pred_fallthru
        _
      %p256 = scmp.le.s32.totalorder 1, %s16
      %p257 = scmp.lt.s32.totalorder %s16, 3
      %p258 = pnand %p256, %p257
      %p259 = pneg %p258
      // Predicated region
      $region33: #{tpu_custom_call.1} parent=5 // pred_check
        _
      $region34: #{tpu_custom_call.1} parent=5 // pred_check_branch
        %261 = sbr.rel (%p258) target = $region36
      $region35: #{tpu_custom_call.1} parent=5 // pred_region
        %s262 = ssub.s32 %s16, 1
        %s263 = sand.u32 %s106, 1
        %s264 = scalar_lea.sflag [#allocation5], %s263
        %s265 = sand.u32 %s106, 1
        %s266 = smul.addr %s265, 8
        %s267 = scalar_lea.vmem [#allocation4], %s266
        // Predicated region
        $region37: #{tpu_custom_call.1} parent=35 // pred_check
          %p268 = pneg %p119
        $region38: #{tpu_custom_call.1} parent=35 // pred_check_branch
          %270 = sbr.rel (%p268) target = $region40
        $region39: #{tpu_custom_call.1} parent=35 // pred_region
          %271 = dma.done %s264, 128
        $region40: #{tpu_custom_call.1} parent=35 // pred_fallthru
          _
        %s272 = smul.u32 2, %s27
        %p273 = scmp.lt.s32.totalorder %s26, 1
        %s274 = scalar_select %p273, %s26, 1
        %p275 = scmp.lt.s32.totalorder %s272, 1
        %s276 = scalar_select %p275, %s272, 1
        %s277 = smul.addr %s274, 2
        %s278 = sadd.s32 %s276, %s277
        %s279 = smul.addr %s278, 4
        %s280 = scalar_lea.vmem %s0, %s279
        %p281 = pneg %p63
        %p282 = pneg %p60
        %s283 = smul.u32 2, %s28
        %p284 = scmp.lt.s32.totalorder %s26, 1
        %s285 = scalar_select %p284, %s26, 1
        %p286 = scmp.lt.s32.totalorder %s283, 1
        %s287 = scalar_select %p286, %s283, 1
        %s288 = smul.addr %s285, 2
        %s289 = sadd.s32 %s287, %s288
        %s290 = smul.addr %s289, 4
        %s291 = scalar_lea.vmem %s1, %s290
        %p292 = pneg %p91
        %p293 = pneg %p88
        %s294 = sand.u32 %s106, 1
        %s295 = scalar_lea.sflag [#allocation5], %s294
        %s296 = sand.u32 %s106, 1
        %s297 = smul.addr %s296, 8
        %s298 = scalar_lea.vmem [#allocation4], %s297
        %p299 = pneg %p119
        %p300 = pneg %p116
        %s301 = smul.u32 2, %s27
        %p302 = scmp.lt.s32.totalorder %s26, 1
        %s303 = scalar_select %p302, %s26, 1
        %p304 = scmp.lt.s32.totalorder %s301, 1
        %s305 = scalar_select %p304, %s301, 1
        %s306 = smul.addr %s303, 2
        %s307 = sadd.s32 %s305, %s306
        %s308 = smul.addr %s307, 8
        %s309 = scalar_lea.vmem %s3, %s308
        %p310 = pneg %p147
        %p311 = pneg %p144
        %p312 = pneg %p175
        %p313 = pneg %p172
        %s314 = sand.u32 %s162, 1
        %s315 = scalar_lea.sflag [#allocation6], %s314
        %s316 = sand.u32 %s162, 1
        %s317 = smul.addr %s316, 16
        %s318 = scalar_lea.vmem [#allocation7], %s317
        %s319 = smul.u32 2, %s27
        %p320 = scmp.lt.s32.totalorder %s26, 1
        %s321 = scalar_select %p320, %s26, 1
        %p322 = scmp.lt.s32.totalorder %s319, 1
        %s323 = scalar_select %p322, %s319, 1
        %s324 = smul.addr %s321, 2
        %s325 = sadd.s32 %s323, %s324
        %s326 = smul.addr %s325, 4
        %s327 = scalar_lea.vmem %s0, %s326
        %s328 = smul.u32 2, %s27
        %s329 = smul.u32 2, %s28
        %p330 = scmp.lt.s32.totalorder %s26, 1
        %s331 = scalar_select %p330, %s26, 1
        %p332 = scmp.lt.s32.totalorder %s329, 1
        %s333 = scalar_select %p332, %s329, 1
        %s334 = smul.addr %s331, 2
        %s335 = sadd.s32 %s333, %s334
        %s336 = smul.addr %s335, 4
        %s337 = scalar_lea.vmem %s1, %s336
        %s338 = smul.u32 2, %s28
        %s339 = smul.u32 2, %s28
        %s340 = smul.u32 2, %s27
        %p341 = scmp.lt.s32.totalorder %s26, 1
        %s342 = scalar_select %p341, %s26, 1
        %p343 = scmp.lt.s32.totalorder %s340, 1
        %s344 = scalar_select %p343, %s340, 1
        %s345 = smul.addr %s342, 2
        %s346 = sadd.s32 %s344, %s345
        %s347 = smul.addr %s346, 8
        %s348 = scalar_lea.vmem %s3, %s347
        %s349 = smul.u32 2, %s27
        %s350 = smul.u32 2, %s27
        %p352 = scmp.eq.s32.totalorder %s28, 0
        // Predicated region
        $region41: #{tpu_custom_call.1} parent=35 // pred_check
          %p353 = pneg %p352
        $region42: #{tpu_custom_call.1} parent=35 // pred_check_branch
          %355 = sbr.rel (%p353) target = $region44
        $region43: #{tpu_custom_call.1} parent=35 // pred_region
          %vm356 = vcmask 7168
          %357 = vst.msk [vmem:[#allocation2] sm:$0xff] %vm356, -1e+30
          %358 = vst.msk [vmem:[#allocation2 + $0x8] sm:$0xff] %vm356, -1e+30
          %359 = vst.msk [vmem:[#allocation3] sm:$0xff] %vm356, 0.0
          %360 = vst.msk [vmem:[#allocation3 + $0x8] sm:$0xff] %vm356, 0.0
          %361 = vst [vmem:[%s318] sm:$0xff] 0.0
          %362 = vst [vmem:[%s318 + $0x8] sm:$0xff] 0.0
        $region44: #{tpu_custom_call.1} parent=35 // pred_fallthru
          _
        %v363 = vld [vmem:[%s327] sm:$0xf]
        %v364 = vld [vmem:[%s327 + $0x4] sm:$0xf]
        %v365 = vld [vmem:[%s337] sm:$0xf]
        %v366 = vld [vmem:[%s337 + $0x4] sm:$0xf]
        %v367 = vld [vmem:[%s267] sm:$0xf]
        %v368 = vld [vmem:[%s267 + $0x4] sm:$0xf]
        %v371 = vunpack.c.l.b16 %v363
        %v372 = vunpack.c.l.b16 %v364
        %v373 = vpack.c.b16 %v372, %v371
        %v377 = vunpack.c.l.b16 %v365
        %v378 = vunpack.c.l.b16 %v366
        %v379 = vpack.c.b16 %v378, %v377
        %381 = vmatprep.subr.bf16.mxu0 0
        %382 = vmatpush1.bf16.xpose.msra.mxu0 0
        %383 = vmatprep.subr.bf16.mxu0 0
        %384 = vmatpush1.bf16.xpose.msra.mxu0 0
        %385 = vmatprep.subr.bf16.mxu0 0
        %386 = vmatpush1.bf16.xpose.msra.mxu0 0
        %387 = vmatprep.subr.bf16.mxu0 0
        %388 = vmatpush1.bf16.xpose.msra.mxu0 0
        %389 = vmatprep.subr.bf16.mxu0 0
        %390 = vmatpush1.bf16.xpose.msra.mxu0 0
        %391 = vmatprep.subr.bf16.mxu0 0
        %392 = vmatpush1.bf16.xpose.msra.mxu0 0
        %393 = vmatprep.subr.bf16.mxu0 0
        %394 = vmatpush1.bf16.xpose.msra.mxu0 0
        %395 = vmatprep.subr.bf16.mxu0 0
        %396 = vmatpush1.bf16.xpose.msra.mxu0 %v379
        %397 = vmatprep.subr.bf16.mxu0 0
        %398 = vmatpush2.bf16.xpose.msra.mxu0 0
        %399 = vmatprep.subr.bf16.mxu0 0
        %400 = vmatpush2.bf16.xpose.msra.mxu0 0
        %401 = vmatprep.subr.bf16.mxu0 0
        %402 = vmatpush2.bf16.xpose.msra.mxu0 0
        %403 = vmatprep.subr.bf16.mxu0 0
        %404 = vmatpush2.bf16.xpose.msra.mxu0 0
        %405 = vmatprep.subr.bf16.mxu0 0
        %406 = vmatpush2.bf16.xpose.msra.mxu0 0
        %407 = vmatprep.subr.bf16.mxu0 0
        %408 = vmatpush2.bf16.xpose.msra.mxu0 0
        %409 = vmatprep.subr.bf16.mxu0 0
        %410 = vmatpush2.bf16.xpose.msra.mxu0 0
        %411 = vmatprep.subr.bf16.mxu0 0
        %412 = vmatpush2.bf16.xpose.msra.mxu0 0
        %413 = vmatprep.mubr.bf16.mxu0 0
        %414 = vmatmul.mubr.bf16.gmra.mxu0 %v373
        %v415 = vpop.f32.mrf.mxu0
        %v416 = vadd.f32 0.0, %v415
        %v417 = vpop.f32.mrf.mxu0
        %v418 = vpop.f32.mrf.mxu0
        %v419 = vadd.f32 0.0, %v418
        %v420 = vpop.f32.mrf.mxu0
        %421 = vdwg.mxu0
        %v422 = vld [vmem:[%s348] sm:$0xff]
        %v423 = vld [vmem:[%s348 + $0x8] sm:$0xff]
        %s424 = smul.u32 %s28, 16
        %v425 = vstv %s424
        %v426 = vsub.s32 %v422, %v425
        %v427 = vsub.s32 %v423, %v425
        %v428 = vlaneseq
        %v429 = vand.u32 %v428, 127
        %430 = vset.pattern.permute.xlu0 0
        %431 = vperm.xlu0 %430, %v426
        %v432 = vpop.permute.xlu0 %431
        %433 = vset.pattern.permute.xlu0 0
        %434 = vperm.xlu0 %433, %v427
        %v435 = vpop.permute.xlu0 %434
        %vm436 = vcmp.lt.s32.totalorder %v429, %v432
        %vm437 = vcmp.lt.s32.totalorder %v429, %v435
        %v438 = vsel %vm436, %v416, -1000000.0
        %v439 = vsel %vm437, %v419, -1000000.0
        %v440 = vld [vmem:[#allocation2] sm:$0xff]
        %v441 = vld [vmem:[#allocation2 + $0x8] sm:$0xff]
        %vm442 = vcmask 130048
        %v443 = vsel %vm442, %v438, -inf
        %444 = vmax.xlane.f32.xlu0 %v443
        %v445 = vpop.xlane.xlu0 %444
        %v446 = vsel %vm442, %v439, -inf
        %447 = vmax.xlane.f32.xlu0 %v446
        %v448 = vpop.xlane.xlu0 %447
        %v449 = vmax.f32 %v440, %v445
        %v450 = vmax.f32 %v441, %v448
        %v451 = vsub.f32 %v440, %v449
        %v452 = vsub.f32 %v441, %v450
        %v453 = vmul.f32 %v451, 1.442695
        %v454 = vpow.pop %v453
        %v455 = vmul.f32 %v452, 1.442695
        %v456 = vpow.pop %v455
        %458 = vset.pattern.permute.xlu0 0
        %459 = vperm.xlu0 %458, %v449
        %v460 = vpop.permute.xlu0 %459
        %463 = vset.pattern.permute.xlu0 0
        %464 = vperm.xlu0 %463, %v450
        %v465 = vpop.permute.xlu0 %464
        %v467 = vsub.f32 %v438, %v460
        %v468 = vsub.f32 %v439, %v465
        %v469 = vmul.f32 %v467, 1.442695
        %v470 = vpow.pop %v469
        %v471 = vmul.f32 %v468, 1.442695
        %v472 = vpow.pop %v471
        %v473 = vld [vmem:[#allocation3] sm:$0xff]
        %v474 = vld [vmem:[#allocation3 + $0x8] sm:$0xff]
        %v475 = vmul.f32 %v454, %v473
        %v476 = vmul.f32 %v456, %v474
        %v477 = vsel %vm442, %v470, 0.0
        %478 = vadd.xlane.f32.xlu0 %v477
        %v479 = vpop.xlane.xlu0 %478
        %v480 = vsel %vm442, %v472, 0.0
        %481 = vadd.xlane.f32.xlu0 %v480
        %v482 = vpop.xlane.xlu0 %481
        %v483 = vadd.f32 %v475, %v479
        %v484 = vadd.f32 %v476, %v482
        %vm485 = vcmask 7168
        %486 = vst.msk [vmem:[#allocation3] sm:$0xff] %vm485, %v483
        %487 = vst.msk [vmem:[#allocation3 + $0x8] sm:$0xff] %vm485, %v484
        %v488 = vld [vmem:[%s318] sm:$0xff]
        %v489 = vld [vmem:[%s318 + $0x8] sm:$0xff]
        %491 = vset.pattern.permute.xlu0 0
        %492 = vperm.xlu0 %491, %v454
        %v493 = vpop.permute.xlu0 %492
        %496 = vset.pattern.permute.xlu0 0
        %497 = vperm.xlu0 %496, %v456
        %v498 = vpop.permute.xlu0 %497
        %v500 = vmul.f32 %v493, %v488
        %v501 = vmul.f32 %v498, %v489
        %v502 = vpack.c.bf16 %v472, %v470
        %v505 = vunpack.c.l.b16 %v367
        %v506 = vunpack.c.l.b16 %v368
        %v507 = vpack.c.b16 %v506, %v505
        %v510 = vsel %vm442, %v502, 0
        %512 = vmatprep.subr.bf16.mxu0 0
        %513 = vmatpush1.bf16.msra.mxu0 0
        %514 = vmatprep.subr.bf16.mxu0 0
        %515 = vmatpush1.bf16.msra.mxu0 0
        %516 = vmatprep.subr.bf16.mxu0 0
        %517 = vmatpush1.bf16.msra.mxu0 0
        %518 = vmatprep.subr.bf16.mxu0 0
        %519 = vmatpush1.bf16.msra.mxu0 0
        %520 = vmatprep.subr.bf16.mxu0 0
        %521 = vmatpush1.bf16.msra.mxu0 0
        %522 = vmatprep.subr.bf16.mxu0 0
        %523 = vmatpush1.bf16.msra.mxu0 0
        %524 = vmatprep.subr.bf16.mxu0 0
        %525 = vmatpush1.bf16.msra.mxu0 0
        %526 = vmatprep.subr.bf16.mxu0 0
        %527 = vmatpush1.bf16.msra.mxu0 %v507
        %528 = vmatprep.subr.bf16.mxu0 0
        %529 = vmatpush2.bf16.msra.mxu0 0
        %530 = vmatprep.subr.bf16.mxu0 0
        %531 = vmatpush2.bf16.msra.mxu0 0
        %532 = vmatprep.subr.bf16.mxu0 0
        %533 = vmatpush2.bf16.msra.mxu0 0
        %534 = vmatprep.subr.bf16.mxu0 0
        %535 = vmatpush2.bf16.msra.mxu0 0
        %536 = vmatprep.subr.bf16.mxu0 0
        %537 = vmatpush2.bf16.msra.mxu0 0
        %538 = vmatprep.subr.bf16.mxu0 0
        %539 = vmatpush2.bf16.msra.mxu0 0
        %540 = vmatprep.subr.bf16.mxu0 0
        %541 = vmatpush2.bf16.msra.mxu0 0
        %542 = vmatprep.subr.bf16.mxu0 0
        %543 = vmatpush2.bf16.msra.mxu0 0
        %544 = vmatprep.mubr.bf16.mxu0 0
        %545 = vmatmul.mubr.bf16.gmra.mxu0 %v510
        %v546 = vpop.f32.mrf.mxu0
        %v547 = vadd.f32 0.0, %v546
        %v548 = vpop.f32.mrf.mxu0
        %v549 = vpop.f32.mrf.mxu0
        %v550 = vadd.f32 0.0, %v549
        %v551 = vpop.f32.mrf.mxu0
        %552 = vdwg.mxu0
        %v553 = vadd.f32 %v500, %v547
        %v554 = vadd.f32 %v501, %v550
        %555 = vst [vmem:[%s318] sm:$0xff] %v553
        %556 = vst [vmem:[%s318 + $0x8] sm:$0xff] %v554
        %557 = vst.msk [vmem:[#allocation2] sm:$0xff] %vm485, %v449
        %558 = vst.msk [vmem:[#allocation2 + $0x8] sm:$0xff] %vm485, %v450
        // Predicated region
        $region45: #{tpu_custom_call.1} parent=35 // pred_check
          %p559 = pneg %p352
        $region46: #{tpu_custom_call.1} parent=35 // pred_check_branch
          %561 = sbr.rel (%p559) target = $region48
        $region47: #{tpu_custom_call.1} parent=35 // pred_region
          %v562 = vld [vmem:[%s318] sm:$0xff]
          %v563 = vld [vmem:[%s318 + $0x8] sm:$0xff]
          %v564 = vld [vmem:[#allocation3] sm:$0xff]
          %v565 = vld [vmem:[#allocation3 + $0x8] sm:$0xff]
          %v566 = vrcp.pop %v564
          %v567 = vrcp.pop %v565
          %569 = vset.pattern.permute.xlu0 0
          %570 = vperm.xlu0 %569, %v566
          %v571 = vpop.permute.xlu0 %570
          %574 = vset.pattern.permute.xlu0 0
          %575 = vperm.xlu0 %574, %v567
          %v576 = vpop.permute.xlu0 %575
          %v578 = vmul.f32 %v562, %v571
          %v579 = vmul.f32 %v563, %v576
          %580 = vst [vmem:[%s318] sm:$0xff] %v578
          %581 = vst [vmem:[%s318 + $0x8] sm:$0xff] %v579
        $region48: #{tpu_custom_call.1} parent=35 // pred_fallthru
          _
        %s582 = sand.u32 %s162, 1
        %s583 = scalar_lea.sflag [#allocation6], %s582
        %s584 = sand.u32 %s162, 1
        %s585 = smul.addr %s584, 16
        %s586 = scalar_lea.vmem [#allocation7], %s585
        // Predicated region
        $region49: #{tpu_custom_call.1} parent=35 // pred_check
          %p587 = pneg %p172
        $region50: #{tpu_custom_call.1} parent=35 // pred_check_branch
          %589 = sbr.rel (%p587) target = $region52
        $region51: #{tpu_custom_call.1} parent=35 // pred_region
          %s590 = smul.u32 2, %s27
          %s592 = ssub.s32 256, 256
          %593 = vsyncadd %s583, %s592
          %s594 = smul.addr %s26, 2
          %s595 = sadd.s32 %s590, %s594
          %s596 = smul.addr %s595, 128
          %s597 = scalar_lea.hbm %s4, %s596
          %s598 = sshll.u32 %s586, 4
          %s599 = int_to_ptr.vmem [resolvable:$true] %s598
          %604 = dma.vmem_to_hbm [thread:$0]  %s599, 256, %s597, %s583, 128, 128, 8
        $region52: #{tpu_custom_call.1} parent=35 // pred_fallthru
          _
      $region36: #{tpu_custom_call.1} parent=5 // pred_fallthru
        _
      %p605 = scmp.le.s32.totalorder 2, %s16
      // Predicated region
      $region53: #{tpu_custom_call.1} parent=5 // pred_check
        %p606 = pneg %p605
      $region54: #{tpu_custom_call.1} parent=5 // pred_check_branch
        %608 = sbr.rel (%p606) target = $region56
      $region55: #{tpu_custom_call.1} parent=5 // pred_region
        %s609 = ssub.s32 %s16, 2
        // Predicated region
        $region57: #{tpu_custom_call.1} parent=55 // pred_check
          %p610 = pneg %p178
        $region58: #{tpu_custom_call.1} parent=55 // pred_check_branch
          %612 = sbr.rel (%p610) target = $region60
        $region59: #{tpu_custom_call.1} parent=55 // pred_region
          %s613 = sand.u32 %s163, 1
          %s614 = scalar_lea.sflag [#allocation6], %s613
          %s615 = sand.u32 %s163, 1
          %s616 = smul.addr %s615, 16
          %s617 = scalar_lea.vmem [#allocation7], %s616
          %618 = dma.done %s614, 256
        $region60: #{tpu_custom_call.1} parent=55 // pred_fallthru
          _
      $region56: #{tpu_custom_call.1} parent=5 // pred_fallthru
        _
    $region6: #{tpu_custom_call.1} parent=1 // loop_footer
      %s20 = sadd.s32 1, %s16
    $region7: #{tpu_custom_call.1} parent=1 // loop_footer_branch
      %15 = sbr.rel target = $region3
    $region8: #{tpu_custom_call.1} parent=1 // loop_exit
      _
    %619 = vsyncpa [#allocation5], 1
    %s620 = scalar_lea.sflag [#allocation5], 1
    %621 = vsyncpa %s620, 1
    %622 = vsyncpa [#allocation6], 1
    %s623 = scalar_lea.sflag [#allocation6], 1
    %624 = vsyncpa %s623, 1

</llo_original>
